<compile_context>
chip_gen: v7x
topology: tpu7x:2x2x1
jax: 0.10.0
libtpu: 0.0.40
codegen_flags: <defaults>
</compile_context>

<pallas_src>
import jax
import jax.numpy as jnp
from jax.experimental import pallas as pl
from jax.experimental.pallas import tpu as pltpu


def _round_up(x, m):
    return m * pl.cdiv(x, m)


def _pick_block_b(B, *, max_block=512, split_threshold=128):
    """Adaptive batch tile.

    - Rounded up to 16 rows (bf16 sublane pack), so B=8 costs a 16-row tile
      instead of a 256-row one.
    - Capped at max_block (VMEM stays ~1-2 MiB; per-step pipeline overhead
      amortized at large B).
    - Once the batch is big enough, split into >= 2 tiles so the "parallel"
      batch axis can shard across v7x's two TensorCores.
    """
    b_aligned = _round_up(max(B, 1), 16)
    if b_aligned > max_block:
        return max_block
    if b_aligned >= split_threshold:
        return _round_up(pl.cdiv(b_aligned, 2), 16)
    return b_aligned


def _autoencoder_kernel(
    x_ref,
    w1_ref, b1_ref,      # encoder Linear(input, 256)
    w2_ref, b2_ref,      # encoder Linear(256, 256)
    wld_ref, bld_ref,    # folded latent Linear(256, latent) @ decoder Linear(latent, 256)
    w4_ref, b4_ref,      # decoder Linear(256, 256)
    w5_ref, b5_ref,      # decoder Linear(256, input)
    o_ref,
):
    bf16 = jnp.bfloat16
    f32 = jnp.float32

    x = x_ref[...]                                                  # (TB, IN_P) bf16

    # ---- encoder ----  (Dropout = identity in eval mode)
    h = jnp.dot(x, w1_ref[...], preferred_element_type=f32) + b1_ref[...]
    h = jnp.maximum(h, 0.0).astype(bf16)            # fused ReLU + cast (no f32 re-store)
    h = jnp.dot(h, w2_ref[...], preferred_element_type=f32) + b2_ref[...]
    h = jnp.maximum(h, 0.0).astype(bf16)

    # ---- latent + first decoder layer (no activation between) folded into one matmul ----
    d = jnp.dot(h, wld_ref[...], preferred_element_type=f32) + bld_ref[...]
    d = jnp.maximum(d, 0.0).astype(bf16)

    # ---- rest of decoder ----
    d = jnp.dot(d, w4_ref[...], preferred_element_type=f32) + b4_ref[...]
    d = jnp.maximum(d, 0.0).astype(bf16)
    out = jnp.dot(d, w5_ref[...], preferred_element_type=f32) + b5_ref[...]

    o_ref[...] = out.astype(o_ref.dtype)


def prepare_params(params):
    """One-time weight preparation (hoisted out of the per-call forward path):
    fold latent+first-decoder Linear pair, zero-pad feature dims to lane
    multiples of 128, cast weights to bf16 (biases stay f32)."""
    f32, bf16 = jnp.float32, jnp.bfloat16
    input_size = params["w1"].shape[0]
    hidden = params["w2"].shape[0]                   # 256
    in_p = _round_up(input_size, 128)

    # z = h@Wl + bl ; d = z@W3 + b3  (no activation in between)
    # => d = h@(Wl@W3) + (bl@W3 + b3).  Fold in f32, then cast to bf16.
    wld = jnp.dot(params["wl"].astype(f32), params["w3"].astype(f32))
    bld = jnp.dot(params["bl"].astype(f32), params["w3"].astype(f32)) + params["b3"].astype(f32)

    def pad_w(w, rows, cols):
        r, c = w.shape
        return jnp.pad(w.astype(f32), ((0, rows - r), (0, cols - c))).astype(bf16)

    def pad_b(b, cols):
        return jnp.pad(b.astype(f32), ((0, 0), (0, cols - b.shape[1])))

    prepared = (
        pad_w(params["w1"], in_p, hidden),   pad_b(params["b1"], hidden),
        pad_w(params["w2"], hidden, hidden), pad_b(params["b2"], hidden),
        pad_w(wld, hidden, hidden),          pad_b(bld, hidden),
        pad_w(params["w4"], hidden, hidden), pad_b(params["b4"], hidden),
        pad_w(params["w5"], hidden, in_p),   pad_b(params["b5"], in_p),
    )
    meta = dict(input_size=input_size, hidden=hidden, in_p=in_p)
    return prepared, meta


def complex_autoencoder_forward(x, prepared, meta, *, max_block_b=512,
                                out_dtype=jnp.bfloat16):
    """x: (B, input_size). `prepared`/`meta` from prepare_params (call once, reuse)."""
    B = x.shape[0]
    input_size = meta["input_size"]
    hidden = meta["hidden"]
    in_p = meta["in_p"]

    block_b = _pick_block_b(B, max_block=max_block_b)
    b_pad = _round_up(B, block_b)

    x_p = jnp.pad(x.astype(jnp.float32),
                  ((0, b_pad - B), (0, in_p - input_size))).astype(jnp.bfloat16)

    # x / out tiled over the batch grid; weights & biases use constant
    # index_maps so they are DMA'd once and stay resident in VMEM.
    def const_spec(a):
        return pl.BlockSpec(a.shape, lambda i: (0, 0))

    in_specs = [pl.BlockSpec((block_b, in_p), lambda i: (i, 0))]
    in_specs += [const_spec(a) for a in prepared]
    out_spec = pl.BlockSpec((block_b, in_p), lambda i: (i, 0))

    flops = 2 * b_pad * hidden * (2 * in_p + 3 * hidden)
    bytes_accessed = (
        x_p.size * x_p.dtype.itemsize
        + sum(a.size * a.dtype.itemsize for a in prepared)
        + b_pad * in_p * jnp.dtype(out_dtype).itemsize
    )

    out_p = pl.pallas_call(
        _autoencoder_kernel,
        out_shape=jax.ShapeDtypeStruct((b_pad, in_p), out_dtype),
        grid=(b_pad // block_b,),
        in_specs=in_specs,
        out_specs=out_spec,
        compiler_params=pltpu.CompilerParams(
            dimension_semantics=("parallel",)),
        cost_estimate=pl.CostEstimate(
            flops=flops, transcendentals=0, bytes_accessed=bytes_accessed),
    )(x_p, *prepared)

    # NOTE: for very large B the consumer may prefer the padded (b_pad, in_p)
    # array to avoid an extra HBM round trip; we return the exact shape here.
    return out_p[:B, :input_size]


def init_params(key, input_size, latent_size, dtype=jnp.float32):
    """Deterministic init mimicking PyTorch nn.Linear default (U[-1/sqrt(fan_in), 1/sqrt(fan_in)]).
    Weights are stored transposed as (in_features, out_features)."""
    def linear(k, fan_in, fan_out):
        kw, kb = jax.random.split(k)
        bound = 1.0 / jnp.sqrt(fan_in)
        w = jax.random.uniform(kw, (fan_in, fan_out), dtype, -bound, bound)
        b = jax.random.uniform(kb, (1, fan_out), dtype, -bound, bound)
        return w, b

    ks = jax.random.split(key, 6)
    w1, b1 = linear(ks[0], input_size, 256)
    w2, b2 = linear(ks[1], 256, 256)
    wl, bl = linear(ks[2], 256, latent_size)
    w3, b3 = linear(ks[3], latent_size, 256)
    w4, b4 = linear(ks[4], 256, 256)
    w5, b5 = linear(ks[5], 256, input_size)
    return dict(w1=w1, b1=b1, w2=w2, b2=b2, wl=wl, bl=bl,
                w3=w3, b3=b3, w4=w4, b4=b4, w5=w5, b5=b5)


def reference_forward(x, prepared, meta):
    """Pure-JAX reference using the SAME prepared (folded, padded, bf16) weights
    and numerics as the kernel; differences vs the kernel are limited to f32
    accumulation order and the final bf16 output cast."""
    (w1, b1, w2, b2, wld, bld, w4, b4, w5, b5) = prepared
    bf16, f32 = jnp.bfloat16, jnp.float32
    in_p, input_size = meta["in_p"], meta["input_size"]

    xp = jnp.pad(x.astype(f32), ((0, 0), (0, in_p - input_size))).astype(bf16)

    def lin(a, w, b):
        return jnp.dot(a, w, preferred_element_type=f32) + b

    h = jnp.maximum(lin(xp, w1, b1), 0.0).astype(bf16)
    h = jnp.maximum(lin(h, w2, b2), 0.0).astype(bf16)
    d = jnp.maximum(lin(h, wld, bld), 0.0).astype(bf16)
    d = jnp.maximum(lin(d, w4, b4), 0.0).astype(bf16)
    out = lin(d, w5, b5)
    return out[:, :input_size]


if __name__ == "__main__":
    input_size = 64
    latent_size = 32
    batch = 8

    key = jax.random.PRNGKey(0)
    k_x, k_p = jax.random.split(key)
    x = jax.random.normal(k_x, (batch, input_size), jnp.float32)
    params = init_params(k_p, input_size, latent_size)

    # One-time weight prep (fold + pad + bf16 cast) -- reused across calls.
    prepared, meta = prepare_params(params)
    prepared = jax.tree_util.tree_map(jax.block_until_ready, prepared)

    out = complex_autoencoder_forward(x, prepared, meta)
    out = jax.block_until_ready(out)

    ref = reference_forward(x, prepared, meta)
    assert out.shape == (batch, input_size), out.shape
    out_f32 = out.astype(jnp.float32)
    max_err = float(jnp.max(jnp.abs(out_f32 - ref)))
    assert jnp.allclose(out_f32, ref, atol=1e-2, rtol=1e-2), \
        f"mismatch vs reference, max_err={max_err}"

    print("KERNEL_OK")
</pallas_src>

<mosaic_0001>
module attributes {stable_mosaic.version = 11 : i64} {
  func.func @_autoencoder_kernel(%arg0: i32, %arg1: memref<16x128xbf16, #tpu.memory_space<vmem>>, %arg2: memref<128x256xbf16, #tpu.memory_space<vmem>>, %arg3: memref<1x256xf32, #tpu.memory_space<vmem>>, %arg4: memref<256x256xbf16, #tpu.memory_space<vmem>>, %arg5: memref<1x256xf32, #tpu.memory_space<vmem>>, %arg6: memref<256x256xbf16, #tpu.memory_space<vmem>>, %arg7: memref<1x256xf32, #tpu.memory_space<vmem>>, %arg8: memref<256x256xbf16, #tpu.memory_space<vmem>>, %arg9: memref<1x256xf32, #tpu.memory_space<vmem>>, %arg10: memref<256x128xbf16, #tpu.memory_space<vmem>>, %arg11: memref<1x128xf32, #tpu.memory_space<vmem>>, %arg12: memref<16x128xbf16, #tpu.memory_space<vmem>>) attributes {dimension_semantics = [#tpu.dimension_semantics<parallel>], iteration_bounds = array<i64: 1>, scalar_prefetch = 0 : i64, scratch_operands = 0 : i64, tpu.core_type = #tpu.core_type<tc>, window_params = [{transform_indices = @transform_0, window_bounds = array<i64: 16, 128>}, {pipeline_mode = #tpu.pipeline_mode<synchronous>, transform_indices = @transform_1, window_bounds = array<i64: 128, 256>}, {pipeline_mode = #tpu.pipeline_mode<synchronous>, transform_indices = @transform_2, window_bounds = array<i64: 1, 256>}, {pipeline_mode = #tpu.pipeline_mode<synchronous>, transform_indices = @transform_3, window_bounds = array<i64: 256, 256>}, {pipeline_mode = #tpu.pipeline_mode<synchronous>, transform_indices = @transform_4, window_bounds = array<i64: 1, 256>}, {pipeline_mode = #tpu.pipeline_mode<synchronous>, transform_indices = @transform_5, window_bounds = array<i64: 256, 256>}, {pipeline_mode = #tpu.pipeline_mode<synchronous>, transform_indices = @transform_6, window_bounds = array<i64: 1, 256>}, {pipeline_mode = #tpu.pipeline_mode<synchronous>, transform_indices = @transform_7, window_bounds = array<i64: 256, 256>}, {pipeline_mode = #tpu.pipeline_mode<synchronous>, transform_indices = @transform_8, window_bounds = array<i64: 1, 256>}, {pipeline_mode = #tpu.pipeline_mode<synchronous>, transform_indices = @transform_9, window_bounds = array<i64: 256, 128>}, {pipeline_mode = #tpu.pipeline_mode<synchronous>, transform_indices = @transform_10, window_bounds = array<i64: 1, 128>}, {transform_indices = @transform_11, window_bounds = array<i64: 16, 128>}]} {
    %c0 = arith.constant 0 : index
    %c0_0 = arith.constant 0 : index
    %0 = vector.load %arg1[%c0, %c0_0] : memref<16x128xbf16, #tpu.memory_space<vmem>>, vector<16x128xbf16>
    %c0_1 = arith.constant 0 : index
    %c0_2 = arith.constant 0 : index
    %1 = vector.load %arg2[%c0_1, %c0_2] : memref<128x256xbf16, #tpu.memory_space<vmem>>, vector<128x256xbf16>
    %cst = arith.constant dense<0.000000e+00> : vector<16x256xf32>
    %2 = tpu.matmul %0, %1, %cst {dimension_numbers = #tpu.dot_dimension_numbers<[1], [0], [0], [1], [0, 0, 1, 1], [], []>} : vector<16x128xbf16>, vector<128x256xbf16>, vector<16x256xf32> -> vector<16x256xf32>
    %c0_3 = arith.constant 0 : index
    %c0_4 = arith.constant 0 : index
    %3 = vector.load %arg3[%c0_3, %c0_4] : memref<1x256xf32, #tpu.memory_space<vmem>>, vector<1x256xf32>
    %4 = vector.broadcast %3 : vector<1x256xf32> to vector<16x256xf32>
    %5 = arith.addf %2, %4 : vector<16x256xf32>
    %cst_5 = arith.constant 0.000000e+00 : f32
    %6 = vector.broadcast %cst_5 : f32 to vector<16x256xf32>
    %7 = arith.maximumf %5, %6 : vector<16x256xf32>
    %8 = arith.truncf %7 : vector<16x256xf32> to vector<16x256xbf16>
    %c0_6 = arith.constant 0 : index
    %c0_7 = arith.constant 0 : index
    %9 = vector.load %arg4[%c0_6, %c0_7] : memref<256x256xbf16, #tpu.memory_space<vmem>>, vector<256x256xbf16>
    %cst_8 = arith.constant dense<0.000000e+00> : vector<16x256xf32>
    %10 = tpu.matmul %8, %9, %cst_8 {dimension_numbers = #tpu.dot_dimension_numbers<[1], [0], [0], [1], [0, 0, 1, 1], [], []>} : vector<16x256xbf16>, vector<256x256xbf16>, vector<16x256xf32> -> vector<16x256xf32>
    %c0_9 = arith.constant 0 : index
    %c0_10 = arith.constant 0 : index
    %11 = vector.load %arg5[%c0_9, %c0_10] : memref<1x256xf32, #tpu.memory_space<vmem>>, vector<1x256xf32>
    %12 = vector.broadcast %11 : vector<1x256xf32> to vector<16x256xf32>
    %13 = arith.addf %10, %12 : vector<16x256xf32>
    %cst_11 = arith.constant 0.000000e+00 : f32
    %14 = vector.broadcast %cst_11 : f32 to vector<16x256xf32>
    %15 = arith.maximumf %13, %14 : vector<16x256xf32>
    %16 = arith.truncf %15 : vector<16x256xf32> to vector<16x256xbf16>
    %c0_12 = arith.constant 0 : index
    %c0_13 = arith.constant 0 : index
    %17 = vector.load %arg6[%c0_12, %c0_13] : memref<256x256xbf16, #tpu.memory_space<vmem>>, vector<256x256xbf16>
    %cst_14 = arith.constant dense<0.000000e+00> : vector<16x256xf32>
    %18 = tpu.matmul %16, %17, %cst_14 {dimension_numbers = #tpu.dot_dimension_numbers<[1], [0], [0], [1], [0, 0, 1, 1], [], []>} : vector<16x256xbf16>, vector<256x256xbf16>, vector<16x256xf32> -> vector<16x256xf32>
    %c0_15 = arith.constant 0 : index
    %c0_16 = arith.constant 0 : index
    %19 = vector.load %arg7[%c0_15, %c0_16] : memref<1x256xf32, #tpu.memory_space<vmem>>, vector<1x256xf32>
    %20 = vector.broadcast %19 : vector<1x256xf32> to vector<16x256xf32>
    %21 = arith.addf %18, %20 : vector<16x256xf32>
    %cst_17 = arith.constant 0.000000e+00 : f32
    %22 = vector.broadcast %cst_17 : f32 to vector<16x256xf32>
    %23 = arith.maximumf %21, %22 : vector<16x256xf32>
    %24 = arith.truncf %23 : vector<16x256xf32> to vector<16x256xbf16>
    %c0_18 = arith.constant 0 : index
    %c0_19 = arith.constant 0 : index
    %25 = vector.load %arg8[%c0_18, %c0_19] : memref<256x256xbf16, #tpu.memory_space<vmem>>, vector<256x256xbf16>
    %cst_20 = arith.constant dense<0.000000e+00> : vector<16x256xf32>
    %26 = tpu.matmul %24, %25, %cst_20 {dimension_numbers = #tpu.dot_dimension_numbers<[1], [0], [0], [1], [0, 0, 1, 1], [], []>} : vector<16x256xbf16>, vector<256x256xbf16>, vector<16x256xf32> -> vector<16x256xf32>
    %c0_21 = arith.constant 0 : index
    %c0_22 = arith.constant 0 : index
    %27 = vector.load %arg9[%c0_21, %c0_22] : memref<1x256xf32, #tpu.memory_space<vmem>>, vector<1x256xf32>
    %28 = vector.broadcast %27 : vector<1x256xf32> to vector<16x256xf32>
    %29 = arith.addf %26, %28 : vector<16x256xf32>
    %cst_23 = arith.constant 0.000000e+00 : f32
    %30 = vector.broadcast %cst_23 : f32 to vector<16x256xf32>
    %31 = arith.maximumf %29, %30 : vector<16x256xf32>
    %32 = arith.truncf %31 : vector<16x256xf32> to vector<16x256xbf16>
    %c0_24 = arith.constant 0 : index
    %c0_25 = arith.constant 0 : index
    %33 = vector.load %arg10[%c0_24, %c0_25] : memref<256x128xbf16, #tpu.memory_space<vmem>>, vector<256x128xbf16>
    %cst_26 = arith.constant dense<0.000000e+00> : vector<16x128xf32>
    %34 = tpu.matmul %32, %33, %cst_26 {dimension_numbers = #tpu.dot_dimension_numbers<[1], [0], [0], [1], [0, 0, 1, 1], [], []>} : vector<16x256xbf16>, vector<256x128xbf16>, vector<16x128xf32> -> vector<16x128xf32>
    %c0_27 = arith.constant 0 : index
    %c0_28 = arith.constant 0 : index
    %35 = vector.load %arg11[%c0_27, %c0_28] : memref<1x128xf32, #tpu.memory_space<vmem>>, vector<1x128xf32>
    %36 = vector.broadcast %35 : vector<1x128xf32> to vector<16x128xf32>
    %37 = arith.addf %34, %36 : vector<16x128xf32>
    %38 = arith.truncf %37 : vector<16x128xf32> to vector<16x128xbf16>
    %c0_29 = arith.constant 0 : index
    %c0_30 = arith.constant 0 : index
    %39 = vector.load %arg12[%c0_29, %c0_30] : memref<16x128xbf16, #tpu.memory_space<vmem>>, vector<16x128xbf16>
    tpu.vector_store %arg12[%c0_29, %c0_30], %38 {strides = array<i32>} : memref<16x128xbf16, #tpu.memory_space<vmem>>, vector<16x128xbf16>,
    return
  }
  func.func @transform_0(%arg0: i32) -> (i32, i32) {
    %c0_i32 = arith.constant 0 : i32
    %c0_i32_0 = arith.constant 0 : i32
    return %arg0, %c0_i32 : i32, i32
  }
  func.func @transform_1(%arg0: i32) -> (i32, i32) {
    %c0_i32 = arith.constant 0 : i32
    %c0_i32_0 = arith.constant 0 : i32
    %c0_i32_1 = arith.constant 0 : i32
    return %c0_i32, %c0_i32_0 : i32, i32
  }
  func.func @transform_2(%arg0: i32) -> (i32, i32) {
    %c0_i32 = arith.constant 0 : i32
    %c0_i32_0 = arith.constant 0 : i32
    %c0_i32_1 = arith.constant 0 : i32
    return %c0_i32, %c0_i32_0 : i32, i32
  }
  func.func @transform_3(%arg0: i32) -> (i32, i32) {
    %c0_i32 = arith.constant 0 : i32
    %c0_i32_0 = arith.constant 0 : i32
    %c0_i32_1 = arith.constant 0 : i32
    return %c0_i32, %c0_i32_0 : i32, i32
  }
  func.func @transform_4(%arg0: i32) -> (i32, i32) {
    %c0_i32 = arith.constant 0 : i32
    %c0_i32_0 = arith.constant 0 : i32
    %c0_i32_1 = arith.constant 0 : i32
    return %c0_i32, %c0_i32_0 : i32, i32
  }
  func.func @transform_5(%arg0: i32) -> (i32, i32) {
    %c0_i32 = arith.constant 0 : i32
    %c0_i32_0 = arith.constant 0 : i32
    %c0_i32_1 = arith.constant 0 : i32
    return %c0_i32, %c0_i32_0 : i32, i32
  }
  func.func @transform_6(%arg0: i32) -> (i32, i32) {
    %c0_i32 = arith.constant 0 : i32
    %c0_i32_0 = arith.constant 0 : i32
    %c0_i32_1 = arith.constant 0 : i32
    return %c0_i32, %c0_i32_0 : i32, i32
  }
  func.func @transform_7(%arg0: i32) -> (i32, i32) {
    %c0_i32 = arith.constant 0 : i32
    %c0_i32_0 = arith.constant 0 : i32
    %c0_i32_1 = arith.constant 0 : i32
    return %c0_i32, %c0_i32_0 : i32, i32
  }
  func.func @transform_8(%arg0: i32) -> (i32, i32) {
    %c0_i32 = arith.constant 0 : i32
    %c0_i32_0 = arith.constant 0 : i32
    %c0_i32_1 = arith.constant 0 : i32
    return %c0_i32, %c0_i32_0 : i32, i32
  }
  func.func @transform_9(%arg0: i32) -> (i32, i32) {
    %c0_i32 = arith.constant 0 : i32
    %c0_i32_0 = arith.constant 0 : i32
    %c0_i32_1 = arith.constant 0 : i32
    return %c0_i32, %c0_i32_0 : i32, i32
  }
  func.func @transform_10(%arg0: i32) -> (i32, i32) {
    %c0_i32 = arith.constant 0 : i32
    %c0_i32_0 = arith.constant 0 : i32
    %c0_i32_1 = arith.constant 0 : i32
    return %c0_i32, %c0_i32_0 : i32, i32
  }
  func.func @transform_11(%arg0: i32) -> (i32, i32) {
    %c0_i32 = arith.constant 0 : i32
    %c0_i32_0 = arith.constant 0 : i32
    return %arg0, %c0_i32 : i32, i32
  }
}

</mosaic_0001>

<llo_original>
// kernel: tpu_custom_call.1
$region0: #{tpu_custom_call.1}
  #allocation0 [shape = 'u32[]', space=smem, size = 0x4, offset = 0x4, fixed_abs, tag = 'smem constant byte address 0x4 - core index']
  #allocation1 [shape = 'u32[144,128]{1,0:T(1,128)}', space=vmem, size = 0x12000, scoped, tag = 'internal scratch']
  %s0 = inlined_call_operand.hbm [shape: bf16[16,128], index: 0, kind: input, shape index: {}]
  %s1 = inlined_call_operand.hbm [shape: bf16[128,256], index: 1, kind: input, shape index: {}]
  %s2 = inlined_call_operand.vmem [shape: f32[1,256], index: 2, kind: input, shape index: {}]
  %s3 = inlined_call_operand.hbm [shape: bf16[256,256], index: 3, kind: input, shape index: {}]
  %s4 = inlined_call_operand.vmem [shape: f32[1,256], index: 4, kind: input, shape index: {}]
  %s5 = inlined_call_operand.hbm [shape: bf16[256,256], index: 5, kind: input, shape index: {}]
  %s6 = inlined_call_operand.vmem [shape: f32[1,256], index: 6, kind: input, shape index: {}]
  %s7 = inlined_call_operand.hbm [shape: bf16[256,256], index: 7, kind: input, shape index: {}]
  %s8 = inlined_call_operand.vmem [shape: f32[1,256], index: 8, kind: input, shape index: {}]
  %s9 = inlined_call_operand.hbm [shape: bf16[256,128], index: 9, kind: input, shape index: {}]
  %s10 = inlined_call_operand.vmem [shape: f32[1,128], index: 10, kind: input, shape index: {}]
  %s11 = inlined_call_operand.hbm [shape: bf16[16,128], index: 11, kind: output, shape index: {}]
  %s12 = sld [smem:[#allocation0]]
  $region78: #{tpu_custom_call.1} parent=0
    _
  %s14 = ssub.s32 1, %s12
  %s15 = scalar_select 0, %s14, %s12
  $region1: #{tpu_custom_call.1} parent=0
    #allocation2 [shape = 'u8[4096]{0}', space=vmem, size = 0x1000, scoped, tag = 'input window, operand 0, single buffered']
    #allocation3 [shape = 's32[1]{0}', space=sflag, size = 0x4, scoped, tag = 'scoped memory for tpu_custom_call.1']
    #allocation4 [shape = 's32[1]{0}', space=sflag, size = 0x4, scoped, tag = 'scoped memory for tpu_custom_call.1']
    #allocation5 [shape = 'u8[65536]{0}', space=vmem, size = 0x10000, scoped, tag = 'input window, operand 1, single buffered']
    #allocation6 [shape = 's32[1]{0}', space=sflag, size = 0x4, scoped, tag = 'scoped memory for tpu_custom_call.1']
    #allocation7 [shape = 'u8[131072]{0}', space=vmem, size = 0x20000, scoped, tag = 'input window, operand 3, single buffered']
    #allocation8 [shape = 'u8[131072]{0}', space=vmem, size = 0x20000, scoped, tag = 'input window, operand 5, single buffered']
    #allocation9 [shape = 's32[1]{0}', space=sflag, size = 0x4, scoped, tag = 'scoped memory for tpu_custom_call.1']
    #allocation10 [shape = 'u8[131072]{0}', space=vmem, size = 0x20000, scoped, tag = 'input window, operand 7, single buffered']
    #allocation11 [shape = 'u8[65536]{0}', space=vmem, size = 0x10000, scoped, tag = 'input window, operand 9, single buffered']
    #allocation12 [shape = 's32[1]{0}', space=sflag, size = 0x4, scoped, tag = 'scoped memory for tpu_custom_call.1']
    #allocation13 [shape = 'u8[4096]{0}', space=vmem, size = 0x1000, scoped, tag = 'output window, operand 0, single buffered']
    %16 = vsyncpa [#allocation3], 0
    %17 = vsyncpa [#allocation6], 0
    %18 = vsyncpa [#allocation9], 0
    %19 = vsyncpa [#allocation12], 0
    %20 = vsyncpa [#allocation4], 0
    // Predicated region
    $region2: #{tpu_custom_call.1} parent=1 // pred_check
      _
    $region3: #{tpu_custom_call.1} parent=1 // pred_check_branch
      %22 = sbr.rel (0) target = $region5
    $region4: #{tpu_custom_call.1} parent=1 // pred_region
      %s24 = ssub.s32 128, 128
      %25 = vsyncadd [#allocation3], %s24
      %s26 = sshll.u32 [#allocation2], 4
      %s27 = int_to_ptr.vmem [resolvable:$true] %s26
      %32 = dma.hbm_to_vmem [thread:$0]  %s0, 128, %s27, [#allocation3], 64, 64, 4
    $region5: #{tpu_custom_call.1} parent=1 // pred_fallthru
      _
    // Predicated region
    $region6: #{tpu_custom_call.1} parent=1 // pred_check
      _
    $region7: #{tpu_custom_call.1} parent=1 // pred_check_branch
      %34 = sbr.rel (0) target = $region9
    $region8: #{tpu_custom_call.1} parent=1 // pred_region
      %s36 = ssub.s32 2048, 2048
      %37 = vsyncadd [#allocation6], %s36
      %s38 = sshll.u32 [#allocation5], 4
      %s39 = int_to_ptr.vmem [resolvable:$true] %s38
      %44 = dma.hbm_to_vmem [thread:$0]  %s1, 2048, %s39, [#allocation6], 128, 128, 8
    $region9: #{tpu_custom_call.1} parent=1 // pred_fallthru
      _
    // Predicated region
    $region10: #{tpu_custom_call.1} parent=1 // pred_check
      _
    $region11: #{tpu_custom_call.1} parent=1 // pred_check_branch
      %46 = sbr.rel (0) target = $region13
    $region12: #{tpu_custom_call.1} parent=1 // pred_region
      _
    $region13: #{tpu_custom_call.1} parent=1 // pred_fallthru
      _
    // Predicated region
    $region14: #{tpu_custom_call.1} parent=1 // pred_check
      _
    $region15: #{tpu_custom_call.1} parent=1 // pred_check_branch
      %48 = sbr.rel (0) target = $region17
    $region16: #{tpu_custom_call.1} parent=1 // pred_region
      %s50 = ssub.s32 4096, 4096
      %51 = vsyncadd [#allocation6], %s50
      %s52 = sshll.u32 [#allocation7], 4
      %s53 = int_to_ptr.vmem [resolvable:$true] %s52
      %58 = dma.hbm_to_vmem [thread:$0]  %s3, 4096, %s53, [#allocation6], 128, 128, 8
    $region17: #{tpu_custom_call.1} parent=1 // pred_fallthru
      _
    // Predicated region
    $region18: #{tpu_custom_call.1} parent=1 // pred_check
      _
    $region19: #{tpu_custom_call.1} parent=1 // pred_check_branch
      %60 = sbr.rel (0) target = $region21
    $region20: #{tpu_custom_call.1} parent=1 // pred_region
      _
    $region21: #{tpu_custom_call.1} parent=1 // pred_fallthru
      _
    // Predicated region
    $region22: #{tpu_custom_call.1} parent=1 // pred_check
      _
    $region23: #{tpu_custom_call.1} parent=1 // pred_check_branch
      %62 = sbr.rel (0) target = $region25
    $region24: #{tpu_custom_call.1} parent=1 // pred_region
      %s64 = ssub.s32 4096, 4096
      %65 = vsyncadd [#allocation9], %s64
      %s66 = sshll.u32 [#allocation8], 4
      %s67 = int_to_ptr.vmem [resolvable:$true] %s66
      %72 = dma.hbm_to_vmem [thread:$0]  %s5, 4096, %s67, [#allocation9], 128, 128, 8
    $region25: #{tpu_custom_call.1} parent=1 // pred_fallthru
      _
    // Predicated region
    $region26: #{tpu_custom_call.1} parent=1 // pred_check
      _
    $region27: #{tpu_custom_call.1} parent=1 // pred_check_branch
      %74 = sbr.rel (0) target = $region29
    $region28: #{tpu_custom_call.1} parent=1 // pred_region
      _
    $region29: #{tpu_custom_call.1} parent=1 // pred_fallthru
      _
    // Predicated region
    $region30: #{tpu_custom_call.1} parent=1 // pred_check
      _
    $region31: #{tpu_custom_call.1} parent=1 // pred_check_branch
      %76 = sbr.rel (0) target = $region33
    $region32: #{tpu_custom_call.1} parent=1 // pred_region
      %s78 = ssub.s32 4096, 4096
      %79 = vsyncadd [#allocation9], %s78
      %s80 = sshll.u32 [#allocation10], 4
      %s81 = int_to_ptr.vmem [resolvable:$true] %s80
      %86 = dma.hbm_to_vmem [thread:$0]  %s7, 4096, %s81, [#allocation9], 128, 128, 8
    $region33: #{tpu_custom_call.1} parent=1 // pred_fallthru
      _
    // Predicated region
    $region34: #{tpu_custom_call.1} parent=1 // pred_check
      _
    $region35: #{tpu_custom_call.1} parent=1 // pred_check_branch
      %88 = sbr.rel (0) target = $region37
    $region36: #{tpu_custom_call.1} parent=1 // pred_region
      _
    $region37: #{tpu_custom_call.1} parent=1 // pred_fallthru
      _
    // Predicated region
    $region38: #{tpu_custom_call.1} parent=1 // pred_check
      _
    $region39: #{tpu_custom_call.1} parent=1 // pred_check_branch
      %90 = sbr.rel (0) target = $region41
    $region40: #{tpu_custom_call.1} parent=1 // pred_region
      %s92 = ssub.s32 2048, 2048
      %93 = vsyncadd [#allocation12], %s92
      %s94 = sshll.u32 [#allocation11], 4
      %s95 = int_to_ptr.vmem [resolvable:$true] %s94
      %100 = dma.hbm_to_vmem [thread:$0]  %s9, 2048, %s95, [#allocation12], 64, 64, 4
    $region41: #{tpu_custom_call.1} parent=1 // pred_fallthru
      _
    // Predicated region
    $region42: #{tpu_custom_call.1} parent=1 // pred_check
      _
    $region43: #{tpu_custom_call.1} parent=1 // pred_check_branch
      %102 = sbr.rel (0) target = $region45
    $region44: #{tpu_custom_call.1} parent=1 // pred_region
      _
    $region45: #{tpu_custom_call.1} parent=1 // pred_fallthru
      _
    // Predicated region
    $region46: #{tpu_custom_call.1} parent=1 // pred_check
      _
    $region47: #{tpu_custom_call.1} parent=1 // pred_check_branch
      %104 = sbr.rel (0) target = $region49
    $region48: #{tpu_custom_call.1} parent=1 // pred_region
      %105 = dma.done [#allocation3], 128
    $region49: #{tpu_custom_call.1} parent=1 // pred_fallthru
      _
    // Predicated region
    $region50: #{tpu_custom_call.1} parent=1 // pred_check
      _
    $region51: #{tpu_custom_call.1} parent=1 // pred_check_branch
      %107 = sbr.rel (0) target = $region53
    $region52: #{tpu_custom_call.1} parent=1 // pred_region
      %108 = dma.done [#allocation6], 2048
    $region53: #{tpu_custom_call.1} parent=1 // pred_fallthru
      _
    // Predicated region
    $region54: #{tpu_custom_call.1} parent=1 // pred_check
      _
    $region55: #{tpu_custom_call.1} parent=1 // pred_check_branch
      %110 = sbr.rel (0) target = $region57
    $region56: #{tpu_custom_call.1} parent=1 // pred_region
      %111 = dma.done [#allocation6], 4096
    $region57: #{tpu_custom_call.1} parent=1 // pred_fallthru
      _
    // Predicated region
    $region58: #{tpu_custom_call.1} parent=1 // pred_check
      _
    $region59: #{tpu_custom_call.1} parent=1 // pred_check_branch
      %113 = sbr.rel (0) target = $region61
    $region60: #{tpu_custom_call.1} parent=1 // pred_region
      %114 = dma.done [#allocation9], 4096
    $region61: #{tpu_custom_call.1} parent=1 // pred_fallthru
      _
    // Predicated region
    $region62: #{tpu_custom_call.1} parent=1 // pred_check
      _
    $region63: #{tpu_custom_call.1} parent=1 // pred_check_branch
      %116 = sbr.rel (0) target = $region65
    $region64: #{tpu_custom_call.1} parent=1 // pred_region
      %117 = dma.done [#allocation9], 4096
    $region65: #{tpu_custom_call.1} parent=1 // pred_fallthru
      _
    // Predicated region
    $region66: #{tpu_custom_call.1} parent=1 // pred_check
      _
    $region67: #{tpu_custom_call.1} parent=1 // pred_check_branch
      %119 = sbr.rel (0) target = $region69
    $region68: #{tpu_custom_call.1} parent=1 // pred_region
      %120 = dma.done [#allocation12], 2048
    $region69: #{tpu_custom_call.1} parent=1 // pred_fallthru
      _
    %v122 = vld [vmem:[#allocation2] sm:$0xf]
    %v123 = vld [vmem:[#allocation2 + $0x4] sm:$0xf]
    %v124 = vld [vmem:[#allocation5] sm:$0xff]
    %v125 = vld [vmem:[#allocation5 + $0x8] sm:$0xff]
    %v126 = vld [vmem:[#allocation5 + $0x10] sm:$0xff]
    %v127 = vld [vmem:[#allocation5 + $0x18] sm:$0xff]
    %v128 = vld [vmem:[#allocation5 + $0x20] sm:$0xff]
    %v129 = vld [vmem:[#allocation5 + $0x28] sm:$0xff]
    %v130 = vld [vmem:[#allocation5 + $0x30] sm:$0xff]
    %v131 = vld [vmem:[#allocation5 + $0x38] sm:$0xff]
    %v132 = vld [vmem:[#allocation5 + $0x40] sm:$0xff]
    %v133 = vld [vmem:[#allocation5 + $0x48] sm:$0xff]
    %v134 = vld [vmem:[#allocation5 + $0x50] sm:$0xff]
    %v135 = vld [vmem:[#allocation5 + $0x58] sm:$0xff]
    %v136 = vld [vmem:[#allocation5 + $0x60] sm:$0xff]
    %v137 = vld [vmem:[#allocation5 + $0x68] sm:$0xff]
    %v138 = vld [vmem:[#allocation5 + $0x70] sm:$0xff]
    %v139 = vld [vmem:[#allocation5 + $0x78] sm:$0xff]
    %v140 = vld [vmem:[%s2] sm:$0x3]
    %v142 = vlaneseq
    %v143 = vshrl.u32 %v142, 7
    %v144 = vsub.s32 0, %v143
    %v145 = vrot.slane %v140, %v144
    %v146 = vlaneseq
    %v147 = vshrl.u32 %v146, 7
    %v148 = vsub.s32 1, %v147
    %v149 = vrot.slane %v140, %v148
    %v154 = vunpack.c.l.b16 %v122
    %v155 = vunpack.c.l.b16 %v123
    %v156 = vpack.c.b16 %v155, %v154
    %v174 = vunpack.c.l.b16 %v124
    %v175 = vunpack.c.h.b16 %v124
    %v176 = vunpack.c.l.b16 %v125
    %v177 = vunpack.c.h.b16 %v125
    %v178 = vunpack.c.l.b16 %v126
    %v179 = vunpack.c.h.b16 %v126
    %v180 = vunpack.c.l.b16 %v127
    %v181 = vunpack.c.h.b16 %v127
    %v182 = vunpack.c.l.b16 %v128
    %v183 = vunpack.c.h.b16 %v128
    %v184 = vunpack.c.l.b16 %v129
    %v185 = vunpack.c.h.b16 %v129
    %v186 = vunpack.c.l.b16 %v130
    %v187 = vunpack.c.h.b16 %v130
    %v188 = vunpack.c.l.b16 %v131
    %v189 = vunpack.c.h.b16 %v131
    %v190 = vunpack.c.l.b16 %v132
    %v191 = vunpack.c.h.b16 %v132
    %v192 = vunpack.c.l.b16 %v133
    %v193 = vunpack.c.h.b16 %v133
    %v194 = vunpack.c.l.b16 %v134
    %v195 = vunpack.c.h.b16 %v134
    %v196 = vunpack.c.l.b16 %v135
    %v197 = vunpack.c.h.b16 %v135
    %v198 = vunpack.c.l.b16 %v136
    %v199 = vunpack.c.h.b16 %v136
    %v200 = vunpack.c.l.b16 %v137
    %v201 = vunpack.c.h.b16 %v137
    %v202 = vunpack.c.l.b16 %v138
    %v203 = vunpack.c.h.b16 %v138
    %v204 = vunpack.c.l.b16 %v139
    %v205 = vunpack.c.h.b16 %v139
    %v206 = vpack.c.b16 %v176, %v174
    %v207 = vpack.c.b16 %v177, %v175
    %v208 = vpack.c.b16 %v180, %v178
    %v209 = vpack.c.b16 %v181, %v179
    %v210 = vpack.c.b16 %v184, %v182
    %v211 = vpack.c.b16 %v185, %v183
    %v212 = vpack.c.b16 %v188, %v186
    %v213 = vpack.c.b16 %v189, %v187
    %v214 = vpack.c.b16 %v192, %v190
    %v215 = vpack.c.b16 %v193, %v191
    %v216 = vpack.c.b16 %v196, %v194
    %v217 = vpack.c.b16 %v197, %v195
    %v218 = vpack.c.b16 %v200, %v198
    %v219 = vpack.c.b16 %v201, %v199
    %v220 = vpack.c.b16 %v204, %v202
    %v221 = vpack.c.b16 %v205, %v203
    %238 = vmatprep.subr.bf16.mxu0 %v207
    %239 = vmatpush1.bf16.msra.mxu0 %v206
    %240 = vmatprep.subr.bf16.mxu0 %v209
    %241 = vmatpush1.bf16.msra.mxu0 %v208
    %242 = vmatprep.subr.bf16.mxu0 %v211
    %243 = vmatpush1.bf16.msra.mxu0 %v210
    %244 = vmatprep.subr.bf16.mxu0 %v213
    %245 = vmatpush1.bf16.msra.mxu0 %v212
    %246 = vmatprep.subr.bf16.mxu0 %v215
    %247 = vmatpush1.bf16.msra.mxu0 %v214
    %248 = vmatprep.subr.bf16.mxu0 %v217
    %249 = vmatpush1.bf16.msra.mxu0 %v216
    %250 = vmatprep.subr.bf16.mxu0 %v219
    %251 = vmatpush1.bf16.msra.mxu0 %v218
    %252 = vmatprep.subr.bf16.mxu0 %v221
    %253 = vmatpush1.bf16.msra.mxu0 %v220
    %254 = vmatprep.subr.bf16.mxu0 0
    %255 = vmatpush1.bf16.msra.mxu0 0
    %256 = vmatprep.subr.bf16.mxu0 0
    %257 = vmatpush1.bf16.msra.mxu0 0
    %258 = vmatprep.subr.bf16.mxu0 0
    %259 = vmatpush1.bf16.msra.mxu0 0
    %260 = vmatprep.subr.bf16.mxu0 0
    %261 = vmatpush1.bf16.msra.mxu0 0
    %262 = vmatprep.subr.bf16.mxu0 0
    %263 = vmatpush1.bf16.msra.mxu0 0
    %264 = vmatprep.subr.bf16.mxu0 0
    %265 = vmatpush1.bf16.msra.mxu0 0
    %266 = vmatprep.subr.bf16.mxu0 0
    %267 = vmatpush1.bf16.msra.mxu0 0
    %268 = vmatprep.subr.bf16.mxu0 0
    %269 = vmatpush1.bf16.msra.mxu0 0
    %270 = vmatprep.mubr.bf16.mxu0 0
    %271 = vmatmul.mubr.bf16.gmra.mrb[0].mxu0 %v156
    %v272 = vpop.f32.mrb[0].mxu0
    %v273 = vadd.f32 %v145, %v272
    %v274 = vpop.f32.mrb[0].mxu0
    %v275 = vadd.f32 %v149, %v274
    %v276 = vpop.f32.mrb[0].mxu0
    %v277 = vadd.f32 %v145, %v276
    %v278 = vpop.f32.mrb[0].mxu0
    %v279 = vadd.f32 %v149, %v278
    %280 = vdwg.mxu0
    %v281 = vmax.f32 %v273, 0.0
    %v282 = vmax.f32 %v275, 0.0
    %v283 = vmax.f32 %v277, 0.0
    %v284 = vmax.f32 %v279, 0.0
    %v285 = vpack.c.bf16 %v283, %v281
    %v286 = vpack.c.bf16 %v284, %v282
    %v287 = vld [vmem:[#allocation7] sm:$0xff]
    %v288 = vld [vmem:[#allocation7 + $0x8] sm:$0xff]
    %v289 = vld [vmem:[#allocation7 + $0x10] sm:$0xff]
    %v290 = vld [vmem:[#allocation7 + $0x18] sm:$0xff]
    %v291 = vld [vmem:[#allocation7 + $0x20] sm:$0xff]
    %v292 = vld [vmem:[#allocation7 + $0x28] sm:$0xff]
    %v293 = vld [vmem:[#allocation7 + $0x30] sm:$0xff]
    %v294 = vld [vmem:[#allocation7 + $0x38] sm:$0xff]
    %v295 = vld [vmem:[#allocation7 + $0x40] sm:$0xff]
    %v296 = vld [vmem:[#allocation7 + $0x48] sm:$0xff]
    %v297 = vld [vmem:[#allocation7 + $0x50] sm:$0xff]
    %v298 = vld [vmem:[#allocation7 + $0x58] sm:$0xff]
    %v299 = vld [vmem:[#allocation7 + $0x60] sm:$0xff]
    %v300 = vld [vmem:[#allocation7 + $0x68] sm:$0xff]
    %v301 = vld [vmem:[#allocation7 + $0x70] sm:$0xff]
    %v302 = vld [vmem:[#allocation7 + $0x78] sm:$0xff]
    %v303 = vld [vmem:[#allocation7 + $0x80] sm:$0xff]
    %v304 = vld [vmem:[#allocation7 + $0x88] sm:$0xff]
    %v305 = vld [vmem:[#allocation7 + $0x90] sm:$0xff]
    %v306 = vld [vmem:[#allocation7 + $0x98] sm:$0xff]
    %v307 = vld [vmem:[#allocation7 + $0xa0] sm:$0xff]
    %v308 = vld [vmem:[#allocation7 + $0xa8] sm:$0xff]
    %v309 = vld [vmem:[#allocation7 + $0xb0] sm:$0xff]
    %v310 = vld [vmem:[#allocation7 + $0xb8] sm:$0xff]
    %v311 = vld [vmem:[#allocation7 + $0xc0] sm:$0xff]
    %v312 = vld [vmem:[#allocation7 + $0xc8] sm:$0xff]
    %v313 = vld [vmem:[#allocation7 + $0xd0] sm:$0xff]
    %v314 = vld [vmem:[#allocation7 + $0xd8] sm:$0xff]
    %v315 = vld [vmem:[#allocation7 + $0xe0] sm:$0xff]
    %v316 = vld [vmem:[#allocation7 + $0xe8] sm:$0xff]
    %v317 = vld [vmem:[#allocation7 + $0xf0] sm:$0xff]
    %v318 = vld [vmem:[#allocation7 + $0xf8] sm:$0xff]
    %v319 = vld [vmem:[%s4] sm:$0x3]
    %v321 = vlaneseq
    %v322 = vshrl.u32 %v321, 7
    %v323 = vsub.s32 0, %v322
    %v324 = vrot.slane %v319, %v323
    %v325 = vlaneseq
    %v326 = vshrl.u32 %v325, 7
    %v327 = vsub.s32 1, %v326
    %v328 = vrot.slane %v319, %v327
    %v363 = vunpack.c.l.b16 %v287
    %v364 = vunpack.c.h.b16 %v287
    %v365 = vunpack.c.l.b16 %v288
    %v366 = vunpack.c.h.b16 %v288
    %v367 = vunpack.c.l.b16 %v289
    %v368 = vunpack.c.h.b16 %v289
    %v369 = vunpack.c.l.b16 %v290
    %v370 = vunpack.c.h.b16 %v290
    %v371 = vunpack.c.l.b16 %v291
    %v372 = vunpack.c.h.b16 %v291
    %v373 = vunpack.c.l.b16 %v292
    %v374 = vunpack.c.h.b16 %v292
    %v375 = vunpack.c.l.b16 %v293
    %v376 = vunpack.c.h.b16 %v293
    %v377 = vunpack.c.l.b16 %v294
    %v378 = vunpack.c.h.b16 %v294
    %v379 = vunpack.c.l.b16 %v295
    %v380 = vunpack.c.h.b16 %v295
    %v381 = vunpack.c.l.b16 %v296
    %v382 = vunpack.c.h.b16 %v296
    %v383 = vunpack.c.l.b16 %v297
    %v384 = vunpack.c.h.b16 %v297
    %v385 = vunpack.c.l.b16 %v298
    %v386 = vunpack.c.h.b16 %v298
    %v387 = vunpack.c.l.b16 %v299
    %v388 = vunpack.c.h.b16 %v299
    %v389 = vunpack.c.l.b16 %v300
    %v390 = vunpack.c.h.b16 %v300
    %v391 = vunpack.c.l.b16 %v301
    %v392 = vunpack.c.h.b16 %v301
    %v393 = vunpack.c.l.b16 %v302
    %v394 = vunpack.c.h.b16 %v302
    %v395 = vunpack.c.l.b16 %v303
    %v396 = vunpack.c.h.b16 %v303
    %v397 = vunpack.c.l.b16 %v304
    %v398 = vunpack.c.h.b16 %v304
    %v399 = vunpack.c.l.b16 %v305
    %v400 = vunpack.c.h.b16 %v305
    %v401 = vunpack.c.l.b16 %v306
    %v402 = vunpack.c.h.b16 %v306
    %v403 = vunpack.c.l.b16 %v307
    %v404 = vunpack.c.h.b16 %v307
    %v405 = vunpack.c.l.b16 %v308
    %v406 = vunpack.c.h.b16 %v308
    %v407 = vunpack.c.l.b16 %v309
    %v408 = vunpack.c.h.b16 %v309
    %v409 = vunpack.c.l.b16 %v310
    %v410 = vunpack.c.h.b16 %v310
    %v411 = vunpack.c.l.b16 %v311
    %v412 = vunpack.c.h.b16 %v311
    %v413 = vunpack.c.l.b16 %v312
    %v414 = vunpack.c.h.b16 %v312
    %v415 = vunpack.c.l.b16 %v313
    %v416 = vunpack.c.h.b16 %v313
    %v417 = vunpack.c.l.b16 %v314
    %v418 = vunpack.c.h.b16 %v314
    %v419 = vunpack.c.l.b16 %v315
    %v420 = vunpack.c.h.b16 %v315
    %v421 = vunpack.c.l.b16 %v316
    %v422 = vunpack.c.h.b16 %v316
    %v423 = vunpack.c.l.b16 %v317
    %v424 = vunpack.c.h.b16 %v317
    %v425 = vunpack.c.l.b16 %v318
    %v426 = vunpack.c.h.b16 %v318
    %v427 = vpack.c.b16 %v365, %v363
    %v428 = vpack.c.b16 %v366, %v364
    %v429 = vpack.c.b16 %v369, %v367
    %v430 = vpack.c.b16 %v370, %v368
    %v431 = vpack.c.b16 %v373, %v371
    %v432 = vpack.c.b16 %v374, %v372
    %v433 = vpack.c.b16 %v377, %v375
    %v434 = vpack.c.b16 %v378, %v376
    %v435 = vpack.c.b16 %v381, %v379
    %v436 = vpack.c.b16 %v382, %v380
    %v437 = vpack.c.b16 %v385, %v383
    %v438 = vpack.c.b16 %v386, %v384
    %v439 = vpack.c.b16 %v389, %v387
    %v440 = vpack.c.b16 %v390, %v388
    %v441 = vpack.c.b16 %v393, %v391
    %v442 = vpack.c.b16 %v394, %v392
    %v443 = vpack.c.b16 %v397, %v395
    %v444 = vpack.c.b16 %v398, %v396
    %v445 = vpack.c.b16 %v401, %v399
    %v446 = vpack.c.b16 %v402, %v400
    %v447 = vpack.c.b16 %v405, %v403
    %v448 = vpack.c.b16 %v406, %v404
    %v449 = vpack.c.b16 %v409, %v407
    %v450 = vpack.c.b16 %v410, %v408
    %v451 = vpack.c.b16 %v413, %v411
    %v452 = vpack.c.b16 %v414, %v412
    %v453 = vpack.c.b16 %v417, %v415
    %v454 = vpack.c.b16 %v418, %v416
    %v455 = vpack.c.b16 %v421, %v419
    %v456 = vpack.c.b16 %v422, %v420
    %v457 = vpack.c.b16 %v425, %v423
    %v458 = vpack.c.b16 %v426, %v424
    %491 = vmatprep.subr.bf16.mxu0 %v428
    %492 = vmatpush1.bf16.msra.mxu0 %v427
    %493 = vmatprep.subr.bf16.mxu0 %v430
    %494 = vmatpush1.bf16.msra.mxu0 %v429
    %495 = vmatprep.subr.bf16.mxu0 %v432
    %496 = vmatpush1.bf16.msra.mxu0 %v431
    %497 = vmatprep.subr.bf16.mxu0 %v434
    %498 = vmatpush1.bf16.msra.mxu0 %v433
    %499 = vmatprep.subr.bf16.mxu0 %v436
    %500 = vmatpush1.bf16.msra.mxu0 %v435
    %501 = vmatprep.subr.bf16.mxu0 %v438
    %502 = vmatpush1.bf16.msra.mxu0 %v437
    %503 = vmatprep.subr.bf16.mxu0 %v440
    %504 = vmatpush1.bf16.msra.mxu0 %v439
    %505 = vmatprep.subr.bf16.mxu0 %v442
    %506 = vmatpush1.bf16.msra.mxu0 %v441
    %507 = vmatprep.subr.bf16.mxu0 %v444
    %508 = vmatpush1.bf16.msra.mxu0 %v443
    %509 = vmatprep.subr.bf16.mxu0 %v446
    %510 = vmatpush1.bf16.msra.mxu0 %v445
    %511 = vmatprep.subr.bf16.mxu0 %v448
    %512 = vmatpush1.bf16.msra.mxu0 %v447
    %513 = vmatprep.subr.bf16.mxu0 %v450
    %514 = vmatpush1.bf16.msra.mxu0 %v449
    %515 = vmatprep.subr.bf16.mxu0 %v452
    %516 = vmatpush1.bf16.msra.mxu0 %v451
    %517 = vmatprep.subr.bf16.mxu0 %v454
    %518 = vmatpush1.bf16.msra.mxu0 %v453
    %519 = vmatprep.subr.bf16.mxu0 %v456
    %520 = vmatpush1.bf16.msra.mxu0 %v455
    %521 = vmatprep.subr.bf16.mxu0 %v458
    %522 = vmatpush1.bf16.msra.mxu0 %v457
    %523 = vmatprep.mubr.bf16.mxu0 %v286
    %524 = vmatmul.mubr.bf16.gmra.mrb[0].mxu0 %v285
    %v525 = vpop.f32.mrb[0].mxu0
    %v526 = vadd.f32 %v324, %v525
    %v527 = vpop.f32.mrb[0].mxu0
    %v528 = vadd.f32 %v328, %v527
    %v529 = vpop.f32.mrb[0].mxu0
    %v530 = vadd.f32 %v324, %v529
    %v531 = vpop.f32.mrb[0].mxu0
    %v532 = vadd.f32 %v328, %v531
    %533 = vdwg.mxu0
    %v534 = vmax.f32 %v526, 0.0
    %v535 = vmax.f32 %v528, 0.0
    %v536 = vmax.f32 %v530, 0.0
    %v537 = vmax.f32 %v532, 0.0
    %v538 = vpack.c.bf16 %v536, %v534
    %v539 = vpack.c.bf16 %v537, %v535
    %v540 = vld [vmem:[#allocation8] sm:$0xff]
    %v541 = vld [vmem:[#allocation8 + $0x8] sm:$0xff]
    %v542 = vld [vmem:[#allocation8 + $0x10] sm:$0xff]
    %v543 = vld [vmem:[#allocation8 + $0x18] sm:$0xff]
    %v544 = vld [vmem:[#allocation8 + $0x20] sm:$0xff]
    %v545 = vld [vmem:[#allocation8 + $0x28] sm:$0xff]
    %v546 = vld [vmem:[#allocation8 + $0x30] sm:$0xff]
    %v547 = vld [vmem:[#allocation8 + $0x38] sm:$0xff]
    %v548 = vld [vmem:[#allocation8 + $0x40] sm:$0xff]
    %v549 = vld [vmem:[#allocation8 + $0x48] sm:$0xff]
    %v550 = vld [vmem:[#allocation8 + $0x50] sm:$0xff]
    %v551 = vld [vmem:[#allocation8 + $0x58] sm:$0xff]
    %v552 = vld [vmem:[#allocation8 + $0x60] sm:$0xff]
    %v553 = vld [vmem:[#allocation8 + $0x68] sm:$0xff]
    %v554 = vld [vmem:[#allocation8 + $0x70] sm:$0xff]
    %v555 = vld [vmem:[#allocation8 + $0x78] sm:$0xff]
    %v556 = vld [vmem:[#allocation8 + $0x80] sm:$0xff]
    %v557 = vld [vmem:[#allocation8 + $0x88] sm:$0xff]
    %v558 = vld [vmem:[#allocation8 + $0x90] sm:$0xff]
    %v559 = vld [vmem:[#allocation8 + $0x98] sm:$0xff]
    %v560 = vld [vmem:[#allocation8 + $0xa0] sm:$0xff]
    %v561 = vld [vmem:[#allocation8 + $0xa8] sm:$0xff]
    %v562 = vld [vmem:[#allocation8 + $0xb0] sm:$0xff]
    %v563 = vld [vmem:[#allocation8 + $0xb8] sm:$0xff]
    %v564 = vld [vmem:[#allocation8 + $0xc0] sm:$0xff]
    %v565 = vld [vmem:[#allocation8 + $0xc8] sm:$0xff]
    %v566 = vld [vmem:[#allocation8 + $0xd0] sm:$0xff]
    %v567 = vld [vmem:[#allocation8 + $0xd8] sm:$0xff]
    %v568 = vld [vmem:[#allocation8 + $0xe0] sm:$0xff]
    %v569 = vld [vmem:[#allocation8 + $0xe8] sm:$0xff]
    %v570 = vld [vmem:[#allocation8 + $0xf0] sm:$0xff]
    %v571 = vld [vmem:[#allocation8 + $0xf8] sm:$0xff]
    %v572 = vld [vmem:[%s6] sm:$0x3]
    %v574 = vlaneseq
    %v575 = vshrl.u32 %v574, 7
    %v576 = vsub.s32 0, %v575
    %v577 = vrot.slane %v572, %v576
    %v578 = vlaneseq
    %v579 = vshrl.u32 %v578, 7
    %v580 = vsub.s32 1, %v579
    %v581 = vrot.slane %v572, %v580
    %v616 = vunpack.c.l.b16 %v540
    %v617 = vunpack.c.h.b16 %v540
    %v618 = vunpack.c.l.b16 %v541
    %v619 = vunpack.c.h.b16 %v541
    %v620 = vunpack.c.l.b16 %v542
    %v621 = vunpack.c.h.b16 %v542
    %v622 = vunpack.c.l.b16 %v543
    %v623 = vunpack.c.h.b16 %v543
    %v624 = vunpack.c.l.b16 %v544
    %v625 = vunpack.c.h.b16 %v544
    %v626 = vunpack.c.l.b16 %v545
    %v627 = vunpack.c.h.b16 %v545
    %v628 = vunpack.c.l.b16 %v546
    %v629 = vunpack.c.h.b16 %v546
    %v630 = vunpack.c.l.b16 %v547
    %v631 = vunpack.c.h.b16 %v547
    %v632 = vunpack.c.l.b16 %v548
    %v633 = vunpack.c.h.b16 %v548
    %v634 = vunpack.c.l.b16 %v549
    %v635 = vunpack.c.h.b16 %v549
    %v636 = vunpack.c.l.b16 %v550
    %v637 = vunpack.c.h.b16 %v550
    %v638 = vunpack.c.l.b16 %v551
    %v639 = vunpack.c.h.b16 %v551
    %v640 = vunpack.c.l.b16 %v552
    %v641 = vunpack.c.h.b16 %v552
    %v642 = vunpack.c.l.b16 %v553
    %v643 = vunpack.c.h.b16 %v553
    %v644 = vunpack.c.l.b16 %v554
    %v645 = vunpack.c.h.b16 %v554
    %v646 = vunpack.c.l.b16 %v555
    %v647 = vunpack.c.h.b16 %v555
    %v648 = vunpack.c.l.b16 %v556
    %v649 = vunpack.c.h.b16 %v556
    %v650 = vunpack.c.l.b16 %v557
    %v651 = vunpack.c.h.b16 %v557
    %v652 = vunpack.c.l.b16 %v558
    %v653 = vunpack.c.h.b16 %v558
    %v654 = vunpack.c.l.b16 %v559
    %v655 = vunpack.c.h.b16 %v559
    %v656 = vunpack.c.l.b16 %v560
    %v657 = vunpack.c.h.b16 %v560
    %v658 = vunpack.c.l.b16 %v561
    %v659 = vunpack.c.h.b16 %v561
    %v660 = vunpack.c.l.b16 %v562
    %v661 = vunpack.c.h.b16 %v562
    %v662 = vunpack.c.l.b16 %v563
    %v663 = vunpack.c.h.b16 %v563
    %v664 = vunpack.c.l.b16 %v564
    %v665 = vunpack.c.h.b16 %v564
    %v666 = vunpack.c.l.b16 %v565
    %v667 = vunpack.c.h.b16 %v565
    %v668 = vunpack.c.l.b16 %v566
    %v669 = vunpack.c.h.b16 %v566
    %v670 = vunpack.c.l.b16 %v567
    %v671 = vunpack.c.h.b16 %v567
    %v672 = vunpack.c.l.b16 %v568
    %v673 = vunpack.c.h.b16 %v568
    %v674 = vunpack.c.l.b16 %v569
    %v675 = vunpack.c.h.b16 %v569
    %v676 = vunpack.c.l.b16 %v570
    %v677 = vunpack.c.h.b16 %v570
    %v678 = vunpack.c.l.b16 %v571
    %v679 = vunpack.c.h.b16 %v571
    %v680 = vpack.c.b16 %v618, %v616
    %v681 = vpack.c.b16 %v619, %v617
    %v682 = vpack.c.b16 %v622, %v620
    %v683 = vpack.c.b16 %v623, %v621
    %v684 = vpack.c.b16 %v626, %v624
    %v685 = vpack.c.b16 %v627, %v625
    %v686 = vpack.c.b16 %v630, %v628
    %v687 = vpack.c.b16 %v631, %v629
    %v688 = vpack.c.b16 %v634, %v632
    %v689 = vpack.c.b16 %v635, %v633
    %v690 = vpack.c.b16 %v638, %v636
    %v691 = vpack.c.b16 %v639, %v637
    %v692 = vpack.c.b16 %v642, %v640
    %v693 = vpack.c.b16 %v643, %v641
    %v694 = vpack.c.b16 %v646, %v644
    %v695 = vpack.c.b16 %v647, %v645
    %v696 = vpack.c.b16 %v650, %v648
    %v697 = vpack.c.b16 %v651, %v649
    %v698 = vpack.c.b16 %v654, %v652
    %v699 = vpack.c.b16 %v655, %v653
    %v700 = vpack.c.b16 %v658, %v656
    %v701 = vpack.c.b16 %v659, %v657
    %v702 = vpack.c.b16 %v662, %v660
    %v703 = vpack.c.b16 %v663, %v661
    %v704 = vpack.c.b16 %v666, %v664
    %v705 = vpack.c.b16 %v667, %v665
    %v706 = vpack.c.b16 %v670, %v668
    %v707 = vpack.c.b16 %v671, %v669
    %v708 = vpack.c.b16 %v674, %v672
    %v709 = vpack.c.b16 %v675, %v673
    %v710 = vpack.c.b16 %v678, %v676
    %v711 = vpack.c.b16 %v679, %v677
    %744 = vmatprep.subr.bf16.mxu0 %v681
    %745 = vmatpush1.bf16.msra.mxu0 %v680
    %746 = vmatprep.subr.bf16.mxu0 %v683
    %747 = vmatpush1.bf16.msra.mxu0 %v682
    %748 = vmatprep.subr.bf16.mxu0 %v685
    %749 = vmatpush1.bf16.msra.mxu0 %v684
    %750 = vmatprep.subr.bf16.mxu0 %v687
    %751 = vmatpush1.bf16.msra.mxu0 %v686
    %752 = vmatprep.subr.bf16.mxu0 %v689
    %753 = vmatpush1.bf16.msra.mxu0 %v688
    %754 = vmatprep.subr.bf16.mxu0 %v691
    %755 = vmatpush1.bf16.msra.mxu0 %v690
    %756 = vmatprep.subr.bf16.mxu0 %v693
    %757 = vmatpush1.bf16.msra.mxu0 %v692
    %758 = vmatprep.subr.bf16.mxu0 %v695
    %759 = vmatpush1.bf16.msra.mxu0 %v694
    %760 = vmatprep.subr.bf16.mxu0 %v697
    %761 = vmatpush1.bf16.msra.mxu0 %v696
    %762 = vmatprep.subr.bf16.mxu0 %v699
    %763 = vmatpush1.bf16.msra.mxu0 %v698
    %764 = vmatprep.subr.bf16.mxu0 %v701
    %765 = vmatpush1.bf16.msra.mxu0 %v700
    %766 = vmatprep.subr.bf16.mxu0 %v703
    %767 = vmatpush1.bf16.msra.mxu0 %v702
    %768 = vmatprep.subr.bf16.mxu0 %v705
    %769 = vmatpush1.bf16.msra.mxu0 %v704
    %770 = vmatprep.subr.bf16.mxu0 %v707
    %771 = vmatpush1.bf16.msra.mxu0 %v706
    %772 = vmatprep.subr.bf16.mxu0 %v709
    %773 = vmatpush1.bf16.msra.mxu0 %v708
    %774 = vmatprep.subr.bf16.mxu0 %v711
    %775 = vmatpush1.bf16.msra.mxu0 %v710
    %776 = vmatprep.mubr.bf16.mxu0 %v539
    %777 = vmatmul.mubr.bf16.gmra.mrb[0].mxu0 %v538
    %v778 = vpop.f32.mrb[0].mxu0
    %v779 = vadd.f32 %v577, %v778
    %v780 = vpop.f32.mrb[0].mxu0
    %v781 = vadd.f32 %v581, %v780
    %v782 = vpop.f32.mrb[0].mxu0
    %v783 = vadd.f32 %v577, %v782
    %v784 = vpop.f32.mrb[0].mxu0
    %v785 = vadd.f32 %v581, %v784
    %786 = vdwg.mxu0
    %v787 = vmax.f32 %v779, 0.0
    %v788 = vmax.f32 %v781, 0.0
    %v789 = vmax.f32 %v783, 0.0
    %v790 = vmax.f32 %v785, 0.0
    %v791 = vpack.c.bf16 %v789, %v787
    %v792 = vpack.c.bf16 %v790, %v788
    %v793 = vld [vmem:[#allocation10] sm:$0xff]
    %v794 = vld [vmem:[#allocation10 + $0x8] sm:$0xff]
    %v795 = vld [vmem:[#allocation10 + $0x10] sm:$0xff]
    %v796 = vld [vmem:[#allocation10 + $0x18] sm:$0xff]
    %v797 = vld [vmem:[#allocation10 + $0x20] sm:$0xff]
    %v798 = vld [vmem:[#allocation10 + $0x28] sm:$0xff]
    %v799 = vld [vmem:[#allocation10 + $0x30] sm:$0xff]
    %v800 = vld [vmem:[#allocation10 + $0x38] sm:$0xff]
    %v801 = vld [vmem:[#allocation10 + $0x40] sm:$0xff]
    %v802 = vld [vmem:[#allocation10 + $0x48] sm:$0xff]
    %v803 = vld [vmem:[#allocation10 + $0x50] sm:$0xff]
    %v804 = vld [vmem:[#allocation10 + $0x58] sm:$0xff]
    %v805 = vld [vmem:[#allocation10 + $0x60] sm:$0xff]
    %v806 = vld [vmem:[#allocation10 + $0x68] sm:$0xff]
    %v807 = vld [vmem:[#allocation10 + $0x70] sm:$0xff]
    %v808 = vld [vmem:[#allocation10 + $0x78] sm:$0xff]
    %v809 = vld [vmem:[#allocation10 + $0x80] sm:$0xff]
    %v810 = vld [vmem:[#allocation10 + $0x88] sm:$0xff]
    %v811 = vld [vmem:[#allocation10 + $0x90] sm:$0xff]
    %v812 = vld [vmem:[#allocation10 + $0x98] sm:$0xff]
    %v813 = vld [vmem:[#allocation10 + $0xa0] sm:$0xff]
    %v814 = vld [vmem:[#allocation10 + $0xa8] sm:$0xff]
    %v815 = vld [vmem:[#allocation10 + $0xb0] sm:$0xff]
    %v816 = vld [vmem:[#allocation10 + $0xb8] sm:$0xff]
    %v817 = vld [vmem:[#allocation10 + $0xc0] sm:$0xff]
    %v818 = vld [vmem:[#allocation10 + $0xc8] sm:$0xff]
    %v819 = vld [vmem:[#allocation10 + $0xd0] sm:$0xff]
    %v820 = vld [vmem:[#allocation10 + $0xd8] sm:$0xff]
    %v821 = vld [vmem:[#allocation10 + $0xe0] sm:$0xff]
    %v822 = vld [vmem:[#allocation10 + $0xe8] sm:$0xff]
    %v823 = vld [vmem:[#allocation10 + $0xf0] sm:$0xff]
    %v824 = vld [vmem:[#allocation10 + $0xf8] sm:$0xff]
    %v825 = vld [vmem:[%s8] sm:$0x3]
    %v827 = vlaneseq
    %v828 = vshrl.u32 %v827, 7
    %v829 = vsub.s32 0, %v828
    %v830 = vrot.slane %v825, %v829
    %v831 = vlaneseq
    %v832 = vshrl.u32 %v831, 7
    %v833 = vsub.s32 1, %v832
    %v834 = vrot.slane %v825, %v833
    %v869 = vunpack.c.l.b16 %v793
    %v870 = vunpack.c.h.b16 %v793
    %v871 = vunpack.c.l.b16 %v794
    %v872 = vunpack.c.h.b16 %v794
    %v873 = vunpack.c.l.b16 %v795
    %v874 = vunpack.c.h.b16 %v795
    %v875 = vunpack.c.l.b16 %v796
    %v876 = vunpack.c.h.b16 %v796
    %v877 = vunpack.c.l.b16 %v797
    %v878 = vunpack.c.h.b16 %v797
    %v879 = vunpack.c.l.b16 %v798
    %v880 = vunpack.c.h.b16 %v798
    %v881 = vunpack.c.l.b16 %v799
    %v882 = vunpack.c.h.b16 %v799
    %v883 = vunpack.c.l.b16 %v800
    %v884 = vunpack.c.h.b16 %v800
    %v885 = vunpack.c.l.b16 %v801
    %v886 = vunpack.c.h.b16 %v801
    %v887 = vunpack.c.l.b16 %v802
    %v888 = vunpack.c.h.b16 %v802
    %v889 = vunpack.c.l.b16 %v803
    %v890 = vunpack.c.h.b16 %v803
    %v891 = vunpack.c.l.b16 %v804
    %v892 = vunpack.c.h.b16 %v804
    %v893 = vunpack.c.l.b16 %v805
    %v894 = vunpack.c.h.b16 %v805
    %v895 = vunpack.c.l.b16 %v806
    %v896 = vunpack.c.h.b16 %v806
    %v897 = vunpack.c.l.b16 %v807
    %v898 = vunpack.c.h.b16 %v807
    %v899 = vunpack.c.l.b16 %v808
    %v900 = vunpack.c.h.b16 %v808
    %v901 = vunpack.c.l.b16 %v809
    %v902 = vunpack.c.h.b16 %v809
    %v903 = vunpack.c.l.b16 %v810
    %v904 = vunpack.c.h.b16 %v810
    %v905 = vunpack.c.l.b16 %v811
    %v906 = vunpack.c.h.b16 %v811
    %v907 = vunpack.c.l.b16 %v812
    %v908 = vunpack.c.h.b16 %v812
    %v909 = vunpack.c.l.b16 %v813
    %v910 = vunpack.c.h.b16 %v813
    %v911 = vunpack.c.l.b16 %v814
    %v912 = vunpack.c.h.b16 %v814
    %v913 = vunpack.c.l.b16 %v815
    %v914 = vunpack.c.h.b16 %v815
    %v915 = vunpack.c.l.b16 %v816
    %v916 = vunpack.c.h.b16 %v816
    %v917 = vunpack.c.l.b16 %v817
    %v918 = vunpack.c.h.b16 %v817
    %v919 = vunpack.c.l.b16 %v818
    %v920 = vunpack.c.h.b16 %v818
    %v921 = vunpack.c.l.b16 %v819
    %v922 = vunpack.c.h.b16 %v819
    %v923 = vunpack.c.l.b16 %v820
    %v924 = vunpack.c.h.b16 %v820
    %v925 = vunpack.c.l.b16 %v821
    %v926 = vunpack.c.h.b16 %v821
    %v927 = vunpack.c.l.b16 %v822
    %v928 = vunpack.c.h.b16 %v822
    %v929 = vunpack.c.l.b16 %v823
    %v930 = vunpack.c.h.b16 %v823
    %v931 = vunpack.c.l.b16 %v824
    %v932 = vunpack.c.h.b16 %v824
    %v933 = vpack.c.b16 %v871, %v869
    %v934 = vpack.c.b16 %v872, %v870
    %v935 = vpack.c.b16 %v875, %v873
    %v936 = vpack.c.b16 %v876, %v874
    %v937 = vpack.c.b16 %v879, %v877
    %v938 = vpack.c.b16 %v880, %v878
    %v939 = vpack.c.b16 %v883, %v881
    %v940 = vpack.c.b16 %v884, %v882
    %v941 = vpack.c.b16 %v887, %v885
    %v942 = vpack.c.b16 %v888, %v886
    %v943 = vpack.c.b16 %v891, %v889
    %v944 = vpack.c.b16 %v892, %v890
    %v945 = vpack.c.b16 %v895, %v893
    %v946 = vpack.c.b16 %v896, %v894
    %v947 = vpack.c.b16 %v899, %v897
    %v948 = vpack.c.b16 %v900, %v898
    %v949 = vpack.c.b16 %v903, %v901
    %v950 = vpack.c.b16 %v904, %v902
    %v951 = vpack.c.b16 %v907, %v905
    %v952 = vpack.c.b16 %v908, %v906
    %v953 = vpack.c.b16 %v911, %v909
    %v954 = vpack.c.b16 %v912, %v910
    %v955 = vpack.c.b16 %v915, %v913
    %v956 = vpack.c.b16 %v916, %v914
    %v957 = vpack.c.b16 %v919, %v917
    %v958 = vpack.c.b16 %v920, %v918
    %v959 = vpack.c.b16 %v923, %v921
    %v960 = vpack.c.b16 %v924, %v922
    %v961 = vpack.c.b16 %v927, %v925
    %v962 = vpack.c.b16 %v928, %v926
    %v963 = vpack.c.b16 %v931, %v929
    %v964 = vpack.c.b16 %v932, %v930
    %997 = vmatprep.subr.bf16.mxu0 %v934
    %998 = vmatpush1.bf16.msra.mxu0 %v933
    %999 = vmatprep.subr.bf16.mxu0 %v936
    %1000 = vmatpush1.bf16.msra.mxu0 %v935
    %1001 = vmatprep.subr.bf16.mxu0 %v938
    %1002 = vmatpush1.bf16.msra.mxu0 %v937
    %1003 = vmatprep.subr.bf16.mxu0 %v940
    %1004 = vmatpush1.bf16.msra.mxu0 %v939
    %1005 = vmatprep.subr.bf16.mxu0 %v942
    %1006 = vmatpush1.bf16.msra.mxu0 %v941
    %1007 = vmatprep.subr.bf16.mxu0 %v944
    %1008 = vmatpush1.bf16.msra.mxu0 %v943
    %1009 = vmatprep.subr.bf16.mxu0 %v946
    %1010 = vmatpush1.bf16.msra.mxu0 %v945
    %1011 = vmatprep.subr.bf16.mxu0 %v948
    %1012 = vmatpush1.bf16.msra.mxu0 %v947
    %1013 = vmatprep.subr.bf16.mxu0 %v950
    %1014 = vmatpush1.bf16.msra.mxu0 %v949
    %1015 = vmatprep.subr.bf16.mxu0 %v952
    %1016 = vmatpush1.bf16.msra.mxu0 %v951
    %1017 = vmatprep.subr.bf16.mxu0 %v954
    %1018 = vmatpush1.bf16.msra.mxu0 %v953
    %1019 = vmatprep.subr.bf16.mxu0 %v956
    %1020 = vmatpush1.bf16.msra.mxu0 %v955
    %1021 = vmatprep.subr.bf16.mxu0 %v958
    %1022 = vmatpush1.bf16.msra.mxu0 %v957
    %1023 = vmatprep.subr.bf16.mxu0 %v960
    %1024 = vmatpush1.bf16.msra.mxu0 %v959
    %1025 = vmatprep.subr.bf16.mxu0 %v962
    %1026 = vmatpush1.bf16.msra.mxu0 %v961
    %1027 = vmatprep.subr.bf16.mxu0 %v964
    %1028 = vmatpush1.bf16.msra.mxu0 %v963
    %1029 = vmatprep.mubr.bf16.mxu0 %v792
    %1030 = vmatmul.mubr.bf16.gmra.mrb[0].mxu0 %v791
    %v1031 = vpop.f32.mrb[0].mxu0
    %v1032 = vadd.f32 %v830, %v1031
    %v1033 = vpop.f32.mrb[0].mxu0
    %v1034 = vadd.f32 %v834, %v1033
    %v1035 = vpop.f32.mrb[0].mxu0
    %v1036 = vadd.f32 %v830, %v1035
    %v1037 = vpop.f32.mrb[0].mxu0
    %v1038 = vadd.f32 %v834, %v1037
    %1039 = vdwg.mxu0
    %v1040 = vmax.f32 %v1032, 0.0
    %v1041 = vmax.f32 %v1034, 0.0
    %v1042 = vmax.f32 %v1036, 0.0
    %v1043 = vmax.f32 %v1038, 0.0
    %v1044 = vpack.c.bf16 %v1042, %v1040
    %v1045 = vpack.c.bf16 %v1043, %v1041
    %v1046 = vld [vmem:[#allocation11] sm:$0xf]
    %v1047 = vld [vmem:[#allocation11 + $0x4] sm:$0xf]
    %v1048 = vld [vmem:[#allocation11 + $0x8] sm:$0xf]
    %v1049 = vld [vmem:[#allocation11 + $0xc] sm:$0xf]
    %v1050 = vld [vmem:[#allocation11 + $0x10] sm:$0xf]
    %v1051 = vld [vmem:[#allocation11 + $0x14] sm:$0xf]
    %v1052 = vld [vmem:[#allocation11 + $0x18] sm:$0xf]
    %v1053 = vld [vmem:[#allocation11 + $0x1c] sm:$0xf]
    %v1054 = vld [vmem:[#allocation11 + $0x20] sm:$0xf]
    %v1055 = vld [vmem:[#allocation11 + $0x24] sm:$0xf]
    %v1056 = vld [vmem:[#allocation11 + $0x28] sm:$0xf]
    %v1057 = vld [vmem:[#allocation11 + $0x2c] sm:$0xf]
    %v1058 = vld [vmem:[#allocation11 + $0x30] sm:$0xf]
    %v1059 = vld [vmem:[#allocation11 + $0x34] sm:$0xf]
    %v1060 = vld [vmem:[#allocation11 + $0x38] sm:$0xf]
    %v1061 = vld [vmem:[#allocation11 + $0x3c] sm:$0xf]
    %v1062 = vld [vmem:[#allocation11 + $0x40] sm:$0xf]
    %v1063 = vld [vmem:[#allocation11 + $0x44] sm:$0xf]
    %v1064 = vld [vmem:[#allocation11 + $0x48] sm:$0xf]
    %v1065 = vld [vmem:[#allocation11 + $0x4c] sm:$0xf]
    %v1066 = vld [vmem:[#allocation11 + $0x50] sm:$0xf]
    %v1067 = vld [vmem:[#allocation11 + $0x54] sm:$0xf]
    %v1068 = vld [vmem:[#allocation11 + $0x58] sm:$0xf]
    %v1069 = vld [vmem:[#allocation11 + $0x5c] sm:$0xf]
    %v1070 = vld [vmem:[#allocation11 + $0x60] sm:$0xf]
    %v1071 = vld [vmem:[#allocation11 + $0x64] sm:$0xf]
    %v1072 = vld [vmem:[#allocation11 + $0x68] sm:$0xf]
    %v1073 = vld [vmem:[#allocation11 + $0x6c] sm:$0xf]
    %v1074 = vld [vmem:[#allocation11 + $0x70] sm:$0xf]
    %v1075 = vld [vmem:[#allocation11 + $0x74] sm:$0xf]
    %v1076 = vld [vmem:[#allocation11 + $0x78] sm:$0xf]
    %v1077 = vld [vmem:[#allocation11 + $0x7c] sm:$0xf]
    %v1078 = vld [vmem:[%s10] sm:$0x1]
    %v1080 = vlaneseq
    %v1081 = vshrl.u32 %v1080, 7
    %v1082 = vsub.s32 0, %v1081
    %v1083 = vrot.slane %v1078, %v1082
    %v1117 = vunpack.c.l.b16 %v1046
    %v1118 = vunpack.c.l.b16 %v1047
    %v1119 = vunpack.c.l.b16 %v1048
    %v1120 = vunpack.c.l.b16 %v1049
    %v1121 = vunpack.c.l.b16 %v1050
    %v1122 = vunpack.c.l.b16 %v1051
    %v1123 = vunpack.c.l.b16 %v1052
    %v1124 = vunpack.c.l.b16 %v1053
    %v1125 = vunpack.c.l.b16 %v1054
    %v1126 = vunpack.c.l.b16 %v1055
    %v1127 = vunpack.c.l.b16 %v1056
    %v1128 = vunpack.c.l.b16 %v1057
    %v1129 = vunpack.c.l.b16 %v1058
    %v1130 = vunpack.c.l.b16 %v1059
    %v1131 = vunpack.c.l.b16 %v1060
    %v1132 = vunpack.c.l.b16 %v1061
    %v1133 = vunpack.c.l.b16 %v1062
    %v1134 = vunpack.c.l.b16 %v1063
    %v1135 = vunpack.c.l.b16 %v1064
    %v1136 = vunpack.c.l.b16 %v1065
    %v1137 = vunpack.c.l.b16 %v1066
    %v1138 = vunpack.c.l.b16 %v1067
    %v1139 = vunpack.c.l.b16 %v1068
    %v1140 = vunpack.c.l.b16 %v1069
    %v1141 = vunpack.c.l.b16 %v1070
    %v1142 = vunpack.c.l.b16 %v1071
    %v1143 = vunpack.c.l.b16 %v1072
    %v1144 = vunpack.c.l.b16 %v1073
    %v1145 = vunpack.c.l.b16 %v1074
    %v1146 = vunpack.c.l.b16 %v1075
    %v1147 = vunpack.c.l.b16 %v1076
    %v1148 = vunpack.c.l.b16 %v1077
    %v1149 = vpack.c.b16 %v1118, %v1117
    %v1150 = vpack.c.b16 %v1120, %v1119
    %v1151 = vpack.c.b16 %v1122, %v1121
    %v1152 = vpack.c.b16 %v1124, %v1123
    %v1153 = vpack.c.b16 %v1126, %v1125
    %v1154 = vpack.c.b16 %v1128, %v1127
    %v1155 = vpack.c.b16 %v1130, %v1129
    %v1156 = vpack.c.b16 %v1132, %v1131
    %v1157 = vpack.c.b16 %v1134, %v1133
    %v1158 = vpack.c.b16 %v1136, %v1135
    %v1159 = vpack.c.b16 %v1138, %v1137
    %v1160 = vpack.c.b16 %v1140, %v1139
    %v1161 = vpack.c.b16 %v1142, %v1141
    %v1162 = vpack.c.b16 %v1144, %v1143
    %v1163 = vpack.c.b16 %v1146, %v1145
    %v1164 = vpack.c.b16 %v1148, %v1147
    %1181 = vmatprep.subr.bf16.mxu0 0
    %1182 = vmatpush1.bf16.msra.mxu0 %v1149
    %1183 = vmatprep.subr.bf16.mxu0 0
    %1184 = vmatpush1.bf16.msra.mxu0 %v1150
    %1185 = vmatprep.subr.bf16.mxu0 0
    %1186 = vmatpush1.bf16.msra.mxu0 %v1151
    %1187 = vmatprep.subr.bf16.mxu0 0
    %1188 = vmatpush1.bf16.msra.mxu0 %v1152
    %1189 = vmatprep.subr.bf16.mxu0 0
    %1190 = vmatpush1.bf16.msra.mxu0 %v1153
    %1191 = vmatprep.subr.bf16.mxu0 0
    %1192 = vmatpush1.bf16.msra.mxu0 %v1154
    %1193 = vmatprep.subr.bf16.mxu0 0
    %1194 = vmatpush1.bf16.msra.mxu0 %v1155
    %1195 = vmatprep.subr.bf16.mxu0 0
    %1196 = vmatpush1.bf16.msra.mxu0 %v1156
    %1197 = vmatprep.subr.bf16.mxu0 0
    %1198 = vmatpush1.bf16.msra.mxu0 %v1157
    %1199 = vmatprep.subr.bf16.mxu0 0
    %1200 = vmatpush1.bf16.msra.mxu0 %v1158
    %1201 = vmatprep.subr.bf16.mxu0 0
    %1202 = vmatpush1.bf16.msra.mxu0 %v1159
    %1203 = vmatprep.subr.bf16.mxu0 0
    %1204 = vmatpush1.bf16.msra.mxu0 %v1160
    %1205 = vmatprep.subr.bf16.mxu0 0
    %1206 = vmatpush1.bf16.msra.mxu0 %v1161
    %1207 = vmatprep.subr.bf16.mxu0 0
    %1208 = vmatpush1.bf16.msra.mxu0 %v1162
    %1209 = vmatprep.subr.bf16.mxu0 0
    %1210 = vmatpush1.bf16.msra.mxu0 %v1163
    %1211 = vmatprep.subr.bf16.mxu0 0
    %1212 = vmatpush1.bf16.msra.mxu0 %v1164
    %1213 = vmatprep.mubr.bf16.mxu0 %v1045
    %1214 = vmatmul.mubr.bf16.gmra.mrb[0].mxu0 %v1044
    %v1215 = vpop.f32.mrb[0].mxu0
    %v1216 = vadd.f32 %v1083, %v1215
    %v1217 = vpop.f32.mrb[0].mxu0
    %v1218 = vpop.f32.mrb[0].mxu0
    %v1219 = vadd.f32 %v1083, %v1218
    %v1220 = vpop.f32.mrb[0].mxu0
    %1221 = vdwg.mxu0
    %v1222 = vpack.c.bf16 %v1219, %v1216
    %v1224 = vunpack.c.l.b16 %v1222
    %v1225 = vunpack.c.h.b16 %v1222
    %v1226 = vpack.c.b16 %v1224, %v1224
    %v1227 = vpack.c.b16 %v1225, %v1225
    %1230 = vst [vmem:[#allocation13] sm:$0xf] %v1226
    %1231 = vst [vmem:[#allocation13 + $0x4] sm:$0xf] %v1227
    // Predicated region
    $region70: #{tpu_custom_call.1} parent=1 // pred_check
      _
    $region71: #{tpu_custom_call.1} parent=1 // pred_check_branch
      %1233 = sbr.rel (0) target = $region73
    $region72: #{tpu_custom_call.1} parent=1 // pred_region
      %s1235 = ssub.s32 128, 128
      %1236 = vsyncadd [#allocation4], %s1235
      %s1237 = sshll.u32 [#allocation13], 4
      %s1238 = int_to_ptr.vmem [resolvable:$true] %s1237
      %1243 = dma.vmem_to_hbm [thread:$0]  %s1238, 128, %s11, [#allocation4], 64, 64, 4
    $region73: #{tpu_custom_call.1} parent=1 // pred_fallthru
      _
    // Predicated region
    $region74: #{tpu_custom_call.1} parent=1 // pred_check
      _
    $region75: #{tpu_custom_call.1} parent=1 // pred_check_branch
      %1245 = sbr.rel (0) target = $region77
    $region76: #{tpu_custom_call.1} parent=1 // pred_region
      %1246 = dma.done [#allocation4], 128
    $region77: #{tpu_custom_call.1} parent=1 // pred_fallthru
      _
    %1247 = vsyncpa [#allocation3], 1
    %1248 = vsyncpa [#allocation6], 1
    %1249 = vsyncpa [#allocation9], 1
    %1250 = vsyncpa [#allocation12], 1
    %1251 = vsyncpa [#allocation4], 1

</llo_original>
